<compile_context>
chip_gen: v7x
topology: tpu7x:2x2x1
jax: 0.10.0
libtpu: 0.0.40
codegen_flags: <defaults>
</compile_context>

<pallas_src>
import numpy as np
import jax
import jax.numpy as jnp
from jax.experimental import pallas as pl
from jax.experimental.pallas import tpu as pltpu

EPS = 1e-5
LANE = 128


def _round_up(x, m):
    return (x + m - 1) // m * m


def _pick_tile_m(M, K, Cout_p, budget=16 * 1024 * 1024):
    """Largest M-tile (from a fixed ladder) whose pipeline buffers fit the budget."""
    w_bytes = 2 * K * Cout_p * 2                       # double-buffered bf16 weights
    per_row = 2 * K * 2 + 2 * Cout_p * 4 + Cout_p * 4  # dbuf patches + dbuf out + acc
    fit = max((budget - w_bytes) // per_row, 256)
    limit = _round_up(M, 256)
    for cand in (2048, 1024, 512, 256):
        if cand <= fit and cand <= limit:
            return cand
    return 256


# ---- pass 1: conv matmul (kept in VMEM) -> per-channel sum / sum-of-squares ------
def _conv_stats_kernel(p_ref, w_ref, s1_ref, s2_ref):
    # p_ref: (tile_m, 9*Cin) bf16, w_ref: (9*Cin, Cout_p) bf16
    acc = jnp.dot(p_ref[...], w_ref[...], preferred_element_type=jnp.float32)

    @pl.when(pl.program_id(0) == 0)
    def _():
        s1_ref[...] = jnp.zeros_like(s1_ref)
        s2_ref[...] = jnp.zeros_like(s2_ref)

    s1_ref[...] += jnp.sum(acc, axis=0, keepdims=True)
    s2_ref[...] += jnp.sum(acc * acc, axis=0, keepdims=True)


# ---- pass 2: fused conv matmul + BN affine + ReLU ---------------------------------
def _conv_bn_relu_kernel(p_ref, w_ref, scale_ref, shift_ref, o_ref):
    acc = jnp.dot(p_ref[...], w_ref[...], preferred_element_type=jnp.float32)
    o_ref[...] = jnp.maximum(acc * scale_ref[...] + shift_ref[...], 0.0)


def conv_batchnorm_relu(x_nchw, w_oihw, b, gamma, beta):
    """Forward of ConvBatchNorm: Conv2d(3x3, pad=1) -> BatchNorm2d(train) -> ReLU."""
    del b  # conv bias cancels exactly under training-mode BN (forward output only)
    N, Cin, H, W = x_nchw.shape
    Cout = w_oihw.shape[0]
    M = N * H * W
    K = 9 * Cin
    Cout_p = _round_up(Cout, LANE)

    # --- glue: im2col folded once into a (M, 9*Cin) bf16 slab ---------------------
    # TODO(synk): a halo-read kernel over the padded NHWC input would avoid this 9x
    # activation duplication in HBM; folded-once im2col is the reviewed fallback.
    x_nhwc = jnp.transpose(x_nchw, (0, 2, 3, 1)).astype(jnp.bfloat16)
    xpad = jnp.pad(x_nhwc, ((0, 0), (1, 1), (1, 1), (0, 0)))
    taps = [xpad[:, dy:dy + H, dx:dx + W, :] for dy in range(3) for dx in range(3)]
    patches = jnp.concatenate(taps, axis=-1).reshape(M, K)        # (M, 9*Cin) bf16

    # weights: (Cout, Cin, 3, 3) -> (dy, dx, Cin, Cout) -> (9*Cin, Cout) -> pad lanes
    w2d = jnp.transpose(w_oihw, (2, 3, 1, 0)).reshape(K, Cout)
    w2d = jnp.pad(w2d, ((0, 0), (0, Cout_p - Cout))).astype(jnp.bfloat16)

    # --- M tiling (zero-pad M; zero rows contribute nothing to sum / sumsq) -------
    tile_m = _pick_tile_m(M, K, Cout_p)
    M_pad = _round_up(M, tile_m)
    if M_pad != M:
        patches = jnp.pad(patches, ((0, M_pad - M), (0, 0)))
    n_tiles = M_pad // tile_m

    # --- pass 1: global per-channel statistics (no conv writeback) -----------------
    s1, s2 = pl.pallas_call(
        _conv_stats_kernel,
        out_shape=(jax.ShapeDtypeStruct((1, Cout_p), jnp.float32),
                   jax.ShapeDtypeStruct((1, Cout_p), jnp.float32)),
        grid=(n_tiles,),
        in_specs=[pl.BlockSpec((tile_m, K), lambda i: (i, 0)),
                  pl.BlockSpec((K, Cout_p), lambda i: (0, 0))],
        out_specs=(pl.BlockSpec((1, Cout_p), lambda i: (0, 0)),
                   pl.BlockSpec((1, Cout_p), lambda i: (0, 0))),
        compiler_params=pltpu.CompilerParams(
            dimension_semantics=("arbitrary",),        # stats outputs are grid-resident
            vmem_limit_bytes=32 * 1024 * 1024),
    )(patches, w2d)

    # --- fold BN(batch stats) + affine into per-channel scale / shift (tiny) -------
    mean = s1[0] / M
    var = jnp.maximum(s2[0] / M - mean * mean, 0.0)
    inv = jax.lax.rsqrt(var + EPS)
    gamma_p = jnp.zeros((Cout_p,), jnp.float32).at[:Cout].set(gamma.astype(jnp.float32))
    beta_p = jnp.zeros((Cout_p,), jnp.float32).at[:Cout].set(beta.astype(jnp.float32))
    scale = (gamma_p * inv).reshape(1, Cout_p)
    shift = (beta_p - mean * gamma_p * inv).reshape(1, Cout_p)

    # --- pass 2: fused conv + normalize + affine + ReLU, fully parallel over M -----
    out2d = pl.pallas_call(
        _conv_bn_relu_kernel,
        out_shape=jax.ShapeDtypeStruct((M_pad, Cout_p), jnp.float32),
        grid=(n_tiles,),
        in_specs=[pl.BlockSpec((tile_m, K), lambda i: (i, 0)),
                  pl.BlockSpec((K, Cout_p), lambda i: (0, 0)),
                  pl.BlockSpec((1, Cout_p), lambda i: (0, 0)),
                  pl.BlockSpec((1, Cout_p), lambda i: (0, 0))],
        out_specs=pl.BlockSpec((tile_m, Cout_p), lambda i: (i, 0)),
        compiler_params=pltpu.CompilerParams(
            dimension_semantics=("parallel",),
            vmem_limit_bytes=32 * 1024 * 1024),
    )(patches, w2d, scale, shift)

    out = out2d[:M, :Cout].reshape(N, H, W, Cout)
    return jnp.transpose(out, (0, 3, 1, 2))


def _reference(x, w, b, gamma, beta):
    """Pure-JAX reference matching torch: Conv2d(3x3,pad=1) -> BN2d(train) -> ReLU."""
    y = jax.lax.conv_general_dilated(
        x, w, window_strides=(1, 1), padding=((1, 1), (1, 1)),
        dimension_numbers=('NCHW', 'OIHW', 'NCHW'))
    y = y + b.reshape(1, -1, 1, 1)
    mean = jnp.mean(y, axis=(0, 2, 3), keepdims=True)
    var = jnp.mean((y - mean) ** 2, axis=(0, 2, 3), keepdims=True)
    y = (y - mean) * jax.lax.rsqrt(var + EPS)
    y = y * gamma.reshape(1, -1, 1, 1) + beta.reshape(1, -1, 1, 1)
    return jnp.maximum(y, 0.0)


if __name__ == "__main__":
    # small shapes consistent with the module: batch=2, in_channels=4,
    # out_channels=8, spatial=16x16
    N, Cin, Cout, H, W = 2, 4, 8, 16, 16

    key = jax.random.PRNGKey(0)
    kx, kw, kb, kg, kbeta = jax.random.split(key, 5)

    x = jax.random.normal(kx, (N, Cin, H, W), dtype=jnp.float32)

    # deterministic parameter init (shapes as in nn.Conv2d / nn.BatchNorm2d)
    fan_in = Cin * 3 * 3
    bound = 1.0 / np.sqrt(fan_in)
    w = jax.random.uniform(kw, (Cout, Cin, 3, 3), jnp.float32, -bound, bound)
    b = jax.random.uniform(kb, (Cout,), jnp.float32, -bound, bound)
    gamma = 1.0 + 0.1 * jax.random.normal(kg, (Cout,), dtype=jnp.float32)
    beta = 0.1 * jax.random.normal(kbeta, (Cout,), dtype=jnp.float32)

    out = conv_batchnorm_relu(x, w, b, gamma, beta)
    out = jax.block_until_ready(out)

    ref = jax.block_until_ready(_reference(x, w, b, gamma, beta))
    np.testing.assert_allclose(np.asarray(out), np.asarray(ref),
                               rtol=5e-2, atol=5e-2)

    print("KERNEL_OK")
</pallas_src>

<mosaic_0001>
module attributes {stable_mosaic.version = 11 : i64} {
  func.func @_conv_stats_kernel(%arg0: i32, %arg1: memref<512x36xbf16, #tpu.memory_space<vmem>>, %arg2: memref<36x128xbf16, #tpu.memory_space<vmem>>, %arg3: memref<1x128xf32, #tpu.memory_space<vmem>>, %arg4: memref<1x128xf32, #tpu.memory_space<vmem>>) attributes {dimension_semantics = [#tpu.dimension_semantics<arbitrary>], iteration_bounds = array<i64: 1>, scalar_prefetch = 0 : i64, scratch_operands = 0 : i64, tpu.core_type = #tpu.core_type<tc>, window_params = [{transform_indices = @transform_0, window_bounds = array<i64: 512, 36>}, {pipeline_mode = #tpu.pipeline_mode<synchronous>, transform_indices = @transform_1, window_bounds = array<i64: 36, 128>}, {pipeline_mode = #tpu.pipeline_mode<synchronous>, transform_indices = @transform_2, window_bounds = array<i64: 1, 128>}, {pipeline_mode = #tpu.pipeline_mode<synchronous>, transform_indices = @transform_3, window_bounds = array<i64: 1, 128>}]} {
    %c0 = arith.constant 0 : index
    %c0_0 = arith.constant 0 : index
    %0 = vector.load %arg1[%c0, %c0_0] : memref<512x36xbf16, #tpu.memory_space<vmem>>, vector<512x36xbf16>
    %c0_1 = arith.constant 0 : index
    %c0_2 = arith.constant 0 : index
    %1 = vector.load %arg2[%c0_1, %c0_2] : memref<36x128xbf16, #tpu.memory_space<vmem>>, vector<36x128xbf16>
    %cst = arith.constant dense<0.000000e+00> : vector<512x128xf32>
    %2 = tpu.matmul %0, %1, %cst {dimension_numbers = #tpu.dot_dimension_numbers<[1], [0], [0], [1], [0, 0, 1, 1], [], []>} : vector<512x36xbf16>, vector<36x128xbf16>, vector<512x128xf32> -> vector<512x128xf32>
    %c0_i32 = arith.constant 0 : i32
    %3 = arith.cmpi eq, %arg0, %c0_i32 : i32
    %4 = arith.extui %3 : i1 to i32
    %c0_i32_3 = arith.constant 0 : i32
    %5 = arith.cmpi ne, %4, %c0_i32_3 : i32
    scf.if %5 {
      %cst_14 = arith.constant 0.000000e+00 : f32
      %17 = vector.broadcast %cst_14 : f32 to vector<1x128xf32>
      %c0_15 = arith.constant 0 : index
      %c0_16 = arith.constant 0 : index
      %18 = vector.load %arg3[%c0_15, %c0_16] : memref<1x128xf32, #tpu.memory_space<vmem>>, vector<1x128xf32>
      tpu.vector_store %arg3[%c0_15, %c0_16], %17 {strides = array<i32>} : memref<1x128xf32, #tpu.memory_space<vmem>>, vector<1x128xf32>,
      %cst_17 = arith.constant 0.000000e+00 : f32
      %19 = vector.broadcast %cst_17 : f32 to vector<1x128xf32>
      %c0_18 = arith.constant 0 : index
      %c0_19 = arith.constant 0 : index
      %20 = vector.load %arg4[%c0_18, %c0_19] : memref<1x128xf32, #tpu.memory_space<vmem>>, vector<1x128xf32>
      tpu.vector_store %arg4[%c0_18, %c0_19], %19 {strides = array<i32>} : memref<1x128xf32, #tpu.memory_space<vmem>>, vector<1x128xf32>,
    } else {
    }
    %c0_4 = arith.constant 0 : index
    %c0_5 = arith.constant 0 : index
    %6 = vector.load %arg3[%c0_4, %c0_5] : memref<1x128xf32, #tpu.memory_space<vmem>>, vector<1x128xf32>
    %cst_6 = arith.constant dense<0.000000e+00> : vector<128xf32>
    %7 = vector.multi_reduction <add>, %2, %cst_6 [0] : vector<512x128xf32> to vector<128xf32>
    %8 = vector.shape_cast %7 : vector<128xf32> to vector<1x128xf32>
    %9 = arith.addf %6, %8 : vector<1x128xf32>
    %c0_7 = arith.constant 0 : index
    %c0_8 = arith.constant 0 : index
    %10 = vector.load %arg3[%c0_7, %c0_8] : memref<1x128xf32, #tpu.memory_space<vmem>>, vector<1x128xf32>
    tpu.vector_store %arg3[%c0_7, %c0_8], %9 {strides = array<i32>} : memref<1x128xf32, #tpu.memory_space<vmem>>, vector<1x128xf32>,
    %c0_9 = arith.constant 0 : index
    %c0_10 = arith.constant 0 : index
    %11 = vector.load %arg4[%c0_9, %c0_10] : memref<1x128xf32, #tpu.memory_space<vmem>>, vector<1x128xf32>
    %12 = arith.mulf %2, %2 : vector<512x128xf32>
    %cst_11 = arith.constant dense<0.000000e+00> : vector<128xf32>
    %13 = vector.multi_reduction <add>, %12, %cst_11 [0] : vector<512x128xf32> to vector<128xf32>
    %14 = vector.shape_cast %13 : vector<128xf32> to vector<1x128xf32>
    %15 = arith.addf %11, %14 : vector<1x128xf32>
    %c0_12 = arith.constant 0 : index
    %c0_13 = arith.constant 0 : index
    %16 = vector.load %arg4[%c0_12, %c0_13] : memref<1x128xf32, #tpu.memory_space<vmem>>, vector<1x128xf32>
    tpu.vector_store %arg4[%c0_12, %c0_13], %15 {strides = array<i32>} : memref<1x128xf32, #tpu.memory_space<vmem>>, vector<1x128xf32>,
    return
  }
  func.func @transform_0(%arg0: i32) -> (i32, i32) {
    %c0_i32 = arith.constant 0 : i32
    %c0_i32_0 = arith.constant 0 : i32
    return %arg0, %c0_i32 : i32, i32
  }
  func.func @transform_1(%arg0: i32) -> (i32, i32) {
    %c0_i32 = arith.constant 0 : i32
    %c0_i32_0 = arith.constant 0 : i32
    %c0_i32_1 = arith.constant 0 : i32
    return %c0_i32, %c0_i32_0 : i32, i32
  }
  func.func @transform_2(%arg0: i32) -> (i32, i32) {
    %c0_i32 = arith.constant 0 : i32
    %c0_i32_0 = arith.constant 0 : i32
    %c0_i32_1 = arith.constant 0 : i32
    return %c0_i32, %c0_i32_0 : i32, i32
  }
  func.func @transform_3(%arg0: i32) -> (i32, i32) {
    %c0_i32 = arith.constant 0 : i32
    %c0_i32_0 = arith.constant 0 : i32
    %c0_i32_1 = arith.constant 0 : i32
    return %c0_i32, %c0_i32_0 : i32, i32
  }
}

</mosaic_0001>

<llo_original>
// kernel: tpu_custom_call.1
$region0: #{tpu_custom_call.1}
  #allocation0 [shape = 'u32[]', space=smem, size = 0x4, offset = 0x4, fixed_abs, tag = 'smem constant byte address 0x4 - core index']
  #allocation1 [shape = 'u32[144,128]{1,0:T(1,128)}', space=vmem, size = 0x12000, scoped, tag = 'internal scratch']
  %s0 = inlined_call_operand.vmem [shape: bf16[512,36], index: 0, kind: input, shape index: {}]
  %s1 = inlined_call_operand.vmem [shape: bf16[36,128], index: 1, kind: input, shape index: {}]
  %s2 = inlined_call_operand.hbm [shape: f32[1,128], index: 2, kind: output, shape index: {0}]
  %s3 = inlined_call_operand.hbm [shape: f32[1,128], index: 3, kind: output, shape index: {1}]
  %4 = xla_tuple %s2, %s3
  %s5 = sld [smem:[#allocation0]]
  $region30: #{tpu_custom_call.1} parent=0
    _
  %s7 = ssub.s32 1, %s5
  %s8 = scalar_select 0, %s7, %s5
  $region1: #{tpu_custom_call.1} parent=0
    #allocation2 [shape = 'u8[512]{0}', space=vmem, size = 0x400, scoped, tag = 'output window, operand 0, single buffered']
    #allocation3 [shape = 's32[1]{0}', space=sflag, size = 0x4, scoped, tag = 'scoped memory for tpu_custom_call.1']
    #allocation4 [shape = 'u8[512]{0}', space=vmem, size = 0x400, scoped, tag = 'output window, operand 1, single buffered']
    #allocation5 [shape = 's32[1]{0}', space=sflag, size = 0x4, scoped, tag = 'scoped memory for tpu_custom_call.1']
    %9 = vsyncpa [#allocation3], 0
    %10 = vsyncpa [#allocation5], 0
    // Predicated region
    $region2: #{tpu_custom_call.1} parent=1 // pred_check
      _
    $region3: #{tpu_custom_call.1} parent=1 // pred_check_branch
      %12 = sbr.rel (0) target = $region5
    $region4: #{tpu_custom_call.1} parent=1 // pred_region
      _
    $region5: #{tpu_custom_call.1} parent=1 // pred_fallthru
      _
    // Predicated region
    $region6: #{tpu_custom_call.1} parent=1 // pred_check
      _
    $region7: #{tpu_custom_call.1} parent=1 // pred_check_branch
      %14 = sbr.rel (0) target = $region9
    $region8: #{tpu_custom_call.1} parent=1 // pred_region
      _
    $region9: #{tpu_custom_call.1} parent=1 // pred_fallthru
      _
    %v16 = vld [vmem:[%s0] sm:$0xf]
    %v17 = vld [vmem:[%s0 + $0x4] sm:$0xf]
    %v18 = vld [vmem:[%s0 + $0x8] sm:$0xf]
    %v19 = vld [vmem:[%s0 + $0xc] sm:$0xf]
    %v20 = vld [vmem:[%s0 + $0x10] sm:$0xf]
    %v21 = vld [vmem:[%s0 + $0x14] sm:$0xf]
    %v22 = vld [vmem:[%s0 + $0x18] sm:$0xf]
    %v23 = vld [vmem:[%s0 + $0x1c] sm:$0xf]
    %v24 = vld [vmem:[%s0 + $0x20] sm:$0xf]
    %v25 = vld [vmem:[%s0 + $0x24] sm:$0xf]
    %v26 = vld [vmem:[%s0 + $0x28] sm:$0xf]
    %v27 = vld [vmem:[%s0 + $0x2c] sm:$0xf]
    %v28 = vld [vmem:[%s0 + $0x30] sm:$0xf]
    %v29 = vld [vmem:[%s0 + $0x34] sm:$0xf]
    %v30 = vld [vmem:[%s0 + $0x38] sm:$0xf]
    %v31 = vld [vmem:[%s0 + $0x3c] sm:$0xf]
    %v32 = vld [vmem:[%s0 + $0x40] sm:$0xf]
    %v33 = vld [vmem:[%s0 + $0x44] sm:$0xf]
    %v34 = vld [vmem:[%s0 + $0x48] sm:$0xf]
    %v35 = vld [vmem:[%s0 + $0x4c] sm:$0xf]
    %v36 = vld [vmem:[%s0 + $0x50] sm:$0xf]
    %v37 = vld [vmem:[%s0 + $0x54] sm:$0xf]
    %v38 = vld [vmem:[%s0 + $0x58] sm:$0xf]
    %v39 = vld [vmem:[%s0 + $0x5c] sm:$0xf]
    %v40 = vld [vmem:[%s0 + $0x60] sm:$0xf]
    %v41 = vld [vmem:[%s0 + $0x64] sm:$0xf]
    %v42 = vld [vmem:[%s0 + $0x68] sm:$0xf]
    %v43 = vld [vmem:[%s0 + $0x6c] sm:$0xf]
    %v44 = vld [vmem:[%s0 + $0x70] sm:$0xf]
    %v45 = vld [vmem:[%s0 + $0x74] sm:$0xf]
    %v46 = vld [vmem:[%s0 + $0x78] sm:$0xf]
    %v47 = vld [vmem:[%s0 + $0x7c] sm:$0xf]
    %v48 = vld [vmem:[%s0 + $0x80] sm:$0xf]
    %v49 = vld [vmem:[%s0 + $0x84] sm:$0xf]
    %v50 = vld [vmem:[%s0 + $0x88] sm:$0xf]
    %v51 = vld [vmem:[%s0 + $0x8c] sm:$0xf]
    %v52 = vld [vmem:[%s0 + $0x90] sm:$0xf]
    %v53 = vld [vmem:[%s0 + $0x94] sm:$0xf]
    %v54 = vld [vmem:[%s0 + $0x98] sm:$0xf]
    %v55 = vld [vmem:[%s0 + $0x9c] sm:$0xf]
    %v56 = vld [vmem:[%s0 + $0xa0] sm:$0xf]
    %v57 = vld [vmem:[%s0 + $0xa4] sm:$0xf]
    %v58 = vld [vmem:[%s0 + $0xa8] sm:$0xf]
    %v59 = vld [vmem:[%s0 + $0xac] sm:$0xf]
    %v60 = vld [vmem:[%s0 + $0xb0] sm:$0xf]
    %v61 = vld [vmem:[%s0 + $0xb4] sm:$0xf]
    %v62 = vld [vmem:[%s0 + $0xb8] sm:$0xf]
    %v63 = vld [vmem:[%s0 + $0xbc] sm:$0xf]
    %v64 = vld [vmem:[%s0 + $0xc0] sm:$0xf]
    %v65 = vld [vmem:[%s0 + $0xc4] sm:$0xf]
    %v66 = vld [vmem:[%s0 + $0xc8] sm:$0xf]
    %v67 = vld [vmem:[%s0 + $0xcc] sm:$0xf]
    %v68 = vld [vmem:[%s0 + $0xd0] sm:$0xf]
    %v69 = vld [vmem:[%s0 + $0xd4] sm:$0xf]
    %v70 = vld [vmem:[%s0 + $0xd8] sm:$0xf]
    %v71 = vld [vmem:[%s0 + $0xdc] sm:$0xf]
    %v72 = vld [vmem:[%s0 + $0xe0] sm:$0xf]
    %v73 = vld [vmem:[%s0 + $0xe4] sm:$0xf]
    %v74 = vld [vmem:[%s0 + $0xe8] sm:$0xf]
    %v75 = vld [vmem:[%s0 + $0xec] sm:$0xf]
    %v76 = vld [vmem:[%s0 + $0xf0] sm:$0xf]
    %v77 = vld [vmem:[%s0 + $0xf4] sm:$0xf]
    %v78 = vld [vmem:[%s0 + $0xf8] sm:$0xf]
    %v79 = vld [vmem:[%s0 + $0xfc] sm:$0xf]
    %v80 = vld [vmem:[%s1] sm:$0xf]
    %v81 = vld [vmem:[%s1 + $0x4] sm:$0xf]
    %v82 = vld [vmem:[%s1 + $0x8] sm:$0xf]
    %v83 = vld [vmem:[%s1 + $0xc] sm:$0xf]
    %v84 = vld [vmem:[%s1 + $0x10] sm:$0x3]
    %v149 = vunpack.c.l.b16 %v16
    %v150 = vunpack.c.l.b16 %v17
    %v151 = vunpack.c.l.b16 %v18
    %v152 = vunpack.c.l.b16 %v19
    %v153 = vunpack.c.l.b16 %v20
    %v154 = vunpack.c.l.b16 %v21
    %v155 = vunpack.c.l.b16 %v22
    %v156 = vunpack.c.l.b16 %v23
    %v157 = vunpack.c.l.b16 %v24
    %v158 = vunpack.c.l.b16 %v25
    %v159 = vunpack.c.l.b16 %v26
    %v160 = vunpack.c.l.b16 %v27
    %v161 = vunpack.c.l.b16 %v28
    %v162 = vunpack.c.l.b16 %v29
    %v163 = vunpack.c.l.b16 %v30
    %v164 = vunpack.c.l.b16 %v31
    %v165 = vunpack.c.l.b16 %v32
    %v166 = vunpack.c.l.b16 %v33
    %v167 = vunpack.c.l.b16 %v34
    %v168 = vunpack.c.l.b16 %v35
    %v169 = vunpack.c.l.b16 %v36
    %v170 = vunpack.c.l.b16 %v37
    %v171 = vunpack.c.l.b16 %v38
    %v172 = vunpack.c.l.b16 %v39
    %v173 = vunpack.c.l.b16 %v40
    %v174 = vunpack.c.l.b16 %v41
    %v175 = vunpack.c.l.b16 %v42
    %v176 = vunpack.c.l.b16 %v43
    %v177 = vunpack.c.l.b16 %v44
    %v178 = vunpack.c.l.b16 %v45
    %v179 = vunpack.c.l.b16 %v46
    %v180 = vunpack.c.l.b16 %v47
    %v181 = vunpack.c.l.b16 %v48
    %v182 = vunpack.c.l.b16 %v49
    %v183 = vunpack.c.l.b16 %v50
    %v184 = vunpack.c.l.b16 %v51
    %v185 = vunpack.c.l.b16 %v52
    %v186 = vunpack.c.l.b16 %v53
    %v187 = vunpack.c.l.b16 %v54
    %v188 = vunpack.c.l.b16 %v55
    %v189 = vunpack.c.l.b16 %v56
    %v190 = vunpack.c.l.b16 %v57
    %v191 = vunpack.c.l.b16 %v58
    %v192 = vunpack.c.l.b16 %v59
    %v193 = vunpack.c.l.b16 %v60
    %v194 = vunpack.c.l.b16 %v61
    %v195 = vunpack.c.l.b16 %v62
    %v196 = vunpack.c.l.b16 %v63
    %v197 = vunpack.c.l.b16 %v64
    %v198 = vunpack.c.l.b16 %v65
    %v199 = vunpack.c.l.b16 %v66
    %v200 = vunpack.c.l.b16 %v67
    %v201 = vunpack.c.l.b16 %v68
    %v202 = vunpack.c.l.b16 %v69
    %v203 = vunpack.c.l.b16 %v70
    %v204 = vunpack.c.l.b16 %v71
    %v205 = vunpack.c.l.b16 %v72
    %v206 = vunpack.c.l.b16 %v73
    %v207 = vunpack.c.l.b16 %v74
    %v208 = vunpack.c.l.b16 %v75
    %v209 = vunpack.c.l.b16 %v76
    %v210 = vunpack.c.l.b16 %v77
    %v211 = vunpack.c.l.b16 %v78
    %v212 = vunpack.c.l.b16 %v79
    %v213 = vpack.c.b16 %v150, %v149
    %v214 = vpack.c.b16 %v152, %v151
    %v215 = vpack.c.b16 %v154, %v153
    %v216 = vpack.c.b16 %v156, %v155
    %v217 = vpack.c.b16 %v158, %v157
    %v218 = vpack.c.b16 %v160, %v159
    %v219 = vpack.c.b16 %v162, %v161
    %v220 = vpack.c.b16 %v164, %v163
    %v221 = vpack.c.b16 %v166, %v165
    %v222 = vpack.c.b16 %v168, %v167
    %v223 = vpack.c.b16 %v170, %v169
    %v224 = vpack.c.b16 %v172, %v171
    %v225 = vpack.c.b16 %v174, %v173
    %v226 = vpack.c.b16 %v176, %v175
    %v227 = vpack.c.b16 %v178, %v177
    %v228 = vpack.c.b16 %v180, %v179
    %v229 = vpack.c.b16 %v182, %v181
    %v230 = vpack.c.b16 %v184, %v183
    %v231 = vpack.c.b16 %v186, %v185
    %v232 = vpack.c.b16 %v188, %v187
    %v233 = vpack.c.b16 %v190, %v189
    %v234 = vpack.c.b16 %v192, %v191
    %v235 = vpack.c.b16 %v194, %v193
    %v236 = vpack.c.b16 %v196, %v195
    %v237 = vpack.c.b16 %v198, %v197
    %v238 = vpack.c.b16 %v200, %v199
    %v239 = vpack.c.b16 %v202, %v201
    %v240 = vpack.c.b16 %v204, %v203
    %v241 = vpack.c.b16 %v206, %v205
    %v242 = vpack.c.b16 %v208, %v207
    %v243 = vpack.c.b16 %v210, %v209
    %v244 = vpack.c.b16 %v212, %v211
    %v250 = vunpack.c.l.b16 %v80
    %v251 = vunpack.c.l.b16 %v81
    %v252 = vunpack.c.l.b16 %v82
    %v253 = vunpack.c.l.b16 %v83
    %v254 = vunpack.c.l.b16 %v84
    %v255 = vpack.c.b16 %v251, %v250
    %v256 = vpack.c.b16 %v253, %v252
    %v257 = vpack.c.b16 %v254, %v254
    %vm260 = vcmask 293888
    %v262 = vsel %vm260, %v213, 0
    %v265 = vsel %vm260, %v214, 0
    %v268 = vsel %vm260, %v215, 0
    %v271 = vsel %vm260, %v216, 0
    %v274 = vsel %vm260, %v217, 0
    %v277 = vsel %vm260, %v218, 0
    %v280 = vsel %vm260, %v219, 0
    %v283 = vsel %vm260, %v220, 0
    %v286 = vsel %vm260, %v221, 0
    %v289 = vsel %vm260, %v222, 0
    %v292 = vsel %vm260, %v223, 0
    %v295 = vsel %vm260, %v224, 0
    %v298 = vsel %vm260, %v225, 0
    %v301 = vsel %vm260, %v226, 0
    %v304 = vsel %vm260, %v227, 0
    %v307 = vsel %vm260, %v228, 0
    %v310 = vsel %vm260, %v229, 0
    %v313 = vsel %vm260, %v230, 0
    %v316 = vsel %vm260, %v231, 0
    %v319 = vsel %vm260, %v232, 0
    %v322 = vsel %vm260, %v233, 0
    %v325 = vsel %vm260, %v234, 0
    %v328 = vsel %vm260, %v235, 0
    %v331 = vsel %vm260, %v236, 0
    %v334 = vsel %vm260, %v237, 0
    %v337 = vsel %vm260, %v238, 0
    %v340 = vsel %vm260, %v239, 0
    %v343 = vsel %vm260, %v240, 0
    %v346 = vsel %vm260, %v241, 0
    %v349 = vsel %vm260, %v242, 0
    %v352 = vsel %vm260, %v243, 0
    %v355 = vsel %vm260, %v244, 0
    %vm357 = vcmask 1041408
    %v359 = vsel %vm357, %v257, 0
    %361 = vmatprep.subr.bf16.mxu0 0
    %362 = vmatpush1.bf16.msra.mxu0 %v255
    %363 = vmatprep.subr.bf16.mxu0 0
    %364 = vmatpush1.bf16.msra.mxu0 %v256
    %365 = vmatprep.subr.bf16.mxu0 0
    %366 = vmatpush1.bf16.msra.mxu0 %v359
    %367 = vmatprep.subr.bf16.mxu0 0
    %368 = vmatpush1.bf16.msra.mxu0 0
    %369 = vmatprep.subr.bf16.mxu0 0
    %370 = vmatpush1.bf16.msra.mxu0 0
    %371 = vmatprep.subr.bf16.mxu0 0
    %372 = vmatpush1.bf16.msra.mxu0 0
    %373 = vmatprep.subr.bf16.mxu0 0
    %374 = vmatpush1.bf16.msra.mxu0 0
    %375 = vmatprep.subr.bf16.mxu0 0
    %376 = vmatpush1.bf16.msra.mxu0 0
    %377 = vmatprep.subr.bf16.mxu0 0
    %378 = vmatpush1.bf16.msra.mxu0 0
    %379 = vmatprep.subr.bf16.mxu0 0
    %380 = vmatpush1.bf16.msra.mxu0 0
    %381 = vmatprep.subr.bf16.mxu0 0
    %382 = vmatpush1.bf16.msra.mxu0 0
    %383 = vmatprep.subr.bf16.mxu0 0
    %384 = vmatpush1.bf16.msra.mxu0 0
    %385 = vmatprep.subr.bf16.mxu0 0
    %386 = vmatpush1.bf16.msra.mxu0 0
    %387 = vmatprep.subr.bf16.mxu0 0
    %388 = vmatpush1.bf16.msra.mxu0 0
    %389 = vmatprep.subr.bf16.mxu0 0
    %390 = vmatpush1.bf16.msra.mxu0 0
    %391 = vmatprep.subr.bf16.mxu0 0
    %392 = vmatpush1.bf16.msra.mxu0 0
    %393 = vmatprep.mubr.bf16.mxu0 0
    %394 = vmatmul.mubr.bf16.gmra.mrb[0].mxu0 %v262
    %v395 = vpop.f32.mrb[0].mxu0
    %v396 = vadd.f32 0.0, %v395
    %v397 = vpop.f32.mrb[0].mxu0
    %v398 = vpop.f32.mrb[0].mxu0
    %v399 = vadd.f32 0.0, %v398
    %v400 = vpop.f32.mrb[0].mxu0
    %401 = vmatprep.mubr.bf16.mxu0 0
    %402 = vmatmul.mubr.bf16.gmra.mrb[0].mxu0 %v265
    %v403 = vpop.f32.mrb[0].mxu0
    %v404 = vadd.f32 0.0, %v403
    %v405 = vpop.f32.mrb[0].mxu0
    %v406 = vpop.f32.mrb[0].mxu0
    %v407 = vadd.f32 0.0, %v406
    %v408 = vpop.f32.mrb[0].mxu0
    %409 = vmatprep.mubr.bf16.mxu0 0
    %410 = vmatmul.mubr.bf16.gmra.mrb[0].mxu0 %v268
    %v411 = vpop.f32.mrb[0].mxu0
    %v412 = vadd.f32 0.0, %v411
    %v413 = vpop.f32.mrb[0].mxu0
    %v414 = vpop.f32.mrb[0].mxu0
    %v415 = vadd.f32 0.0, %v414
    %v416 = vpop.f32.mrb[0].mxu0
    %417 = vmatprep.mubr.bf16.mxu0 0
    %418 = vmatmul.mubr.bf16.gmra.mrb[0].mxu0 %v271
    %v419 = vpop.f32.mrb[0].mxu0
    %v420 = vadd.f32 0.0, %v419
    %v421 = vpop.f32.mrb[0].mxu0
    %v422 = vpop.f32.mrb[0].mxu0
    %v423 = vadd.f32 0.0, %v422
    %v424 = vpop.f32.mrb[0].mxu0
    %425 = vmatprep.mubr.bf16.mxu0 0
    %426 = vmatmul.mubr.bf16.gmra.mrb[0].mxu0 %v274
    %v427 = vpop.f32.mrb[0].mxu0
    %v428 = vadd.f32 0.0, %v427
    %v429 = vpop.f32.mrb[0].mxu0
    %v430 = vpop.f32.mrb[0].mxu0
    %v431 = vadd.f32 0.0, %v430
    %v432 = vpop.f32.mrb[0].mxu0
    %433 = vmatprep.mubr.bf16.mxu0 0
    %434 = vmatmul.mubr.bf16.gmra.mrb[0].mxu0 %v277
    %v435 = vpop.f32.mrb[0].mxu0
    %v436 = vadd.f32 0.0, %v435
    %v437 = vpop.f32.mrb[0].mxu0
    %v438 = vpop.f32.mrb[0].mxu0
    %v439 = vadd.f32 0.0, %v438
    %v440 = vpop.f32.mrb[0].mxu0
    %441 = vmatprep.mubr.bf16.mxu0 0
    %442 = vmatmul.mubr.bf16.gmra.mrb[0].mxu0 %v280
    %v443 = vpop.f32.mrb[0].mxu0
    %v444 = vadd.f32 0.0, %v443
    %v445 = vpop.f32.mrb[0].mxu0
    %v446 = vpop.f32.mrb[0].mxu0
    %v447 = vadd.f32 0.0, %v446
    %v448 = vpop.f32.mrb[0].mxu0
    %449 = vmatprep.mubr.bf16.mxu0 0
    %450 = vmatmul.mubr.bf16.gmra.mrb[0].mxu0 %v283
    %v451 = vpop.f32.mrb[0].mxu0
    %v452 = vadd.f32 0.0, %v451
    %v453 = vpop.f32.mrb[0].mxu0
    %v454 = vpop.f32.mrb[0].mxu0
    %v455 = vadd.f32 0.0, %v454
    %v456 = vpop.f32.mrb[0].mxu0
    %457 = vmatprep.mubr.bf16.mxu0 0
    %458 = vmatmul.mubr.bf16.gmra.mrb[0].mxu0 %v286
    %v459 = vpop.f32.mrb[0].mxu0
    %v460 = vadd.f32 0.0, %v459
    %v461 = vpop.f32.mrb[0].mxu0
    %v462 = vpop.f32.mrb[0].mxu0
    %v463 = vadd.f32 0.0, %v462
    %v464 = vpop.f32.mrb[0].mxu0
    %465 = vmatprep.mubr.bf16.mxu0 0
    %466 = vmatmul.mubr.bf16.gmra.mrb[0].mxu0 %v289
    %v467 = vpop.f32.mrb[0].mxu0
    %v468 = vadd.f32 0.0, %v467
    %v469 = vpop.f32.mrb[0].mxu0
    %v470 = vpop.f32.mrb[0].mxu0
    %v471 = vadd.f32 0.0, %v470
    %v472 = vpop.f32.mrb[0].mxu0
    %473 = vmatprep.mubr.bf16.mxu0 0
    %474 = vmatmul.mubr.bf16.gmra.mrb[0].mxu0 %v292
    %v475 = vpop.f32.mrb[0].mxu0
    %v476 = vadd.f32 0.0, %v475
    %v477 = vpop.f32.mrb[0].mxu0
    %v478 = vpop.f32.mrb[0].mxu0
    %v479 = vadd.f32 0.0, %v478
    %v480 = vpop.f32.mrb[0].mxu0
    %481 = vmatprep.mubr.bf16.mxu0 0
    %482 = vmatmul.mubr.bf16.gmra.mrb[0].mxu0 %v295
    %v483 = vpop.f32.mrb[0].mxu0
    %v484 = vadd.f32 0.0, %v483
    %v485 = vpop.f32.mrb[0].mxu0
    %v486 = vpop.f32.mrb[0].mxu0
    %v487 = vadd.f32 0.0, %v486
    %v488 = vpop.f32.mrb[0].mxu0
    %489 = vmatprep.mubr.bf16.mxu0 0
    %490 = vmatmul.mubr.bf16.gmra.mrb[0].mxu0 %v298
    %v491 = vpop.f32.mrb[0].mxu0
    %v492 = vadd.f32 0.0, %v491
    %v493 = vpop.f32.mrb[0].mxu0
    %v494 = vpop.f32.mrb[0].mxu0
    %v495 = vadd.f32 0.0, %v494
    %v496 = vpop.f32.mrb[0].mxu0
    %497 = vmatprep.mubr.bf16.mxu0 0
    %498 = vmatmul.mubr.bf16.gmra.mrb[0].mxu0 %v301
    %v499 = vpop.f32.mrb[0].mxu0
    %v500 = vadd.f32 0.0, %v499
    %v501 = vpop.f32.mrb[0].mxu0
    %v502 = vpop.f32.mrb[0].mxu0
    %v503 = vadd.f32 0.0, %v502
    %v504 = vpop.f32.mrb[0].mxu0
    %505 = vmatprep.mubr.bf16.mxu0 0
    %506 = vmatmul.mubr.bf16.gmra.mrb[0].mxu0 %v304
    %v507 = vpop.f32.mrb[0].mxu0
    %v508 = vadd.f32 0.0, %v507
    %v509 = vpop.f32.mrb[0].mxu0
    %v510 = vpop.f32.mrb[0].mxu0
    %v511 = vadd.f32 0.0, %v510
    %v512 = vpop.f32.mrb[0].mxu0
    %513 = vmatprep.mubr.bf16.mxu0 0
    %514 = vmatmul.mubr.bf16.gmra.mrb[0].mxu0 %v307
    %v515 = vpop.f32.mrb[0].mxu0
    %v516 = vadd.f32 0.0, %v515
    %v517 = vpop.f32.mrb[0].mxu0
    %v518 = vpop.f32.mrb[0].mxu0
    %v519 = vadd.f32 0.0, %v518
    %v520 = vpop.f32.mrb[0].mxu0
    %521 = vmatprep.mubr.bf16.mxu0 0
    %522 = vmatmul.mubr.bf16.gmra.mrb[0].mxu0 %v310
    %v523 = vpop.f32.mrb[0].mxu0
    %v524 = vadd.f32 0.0, %v523
    %v525 = vpop.f32.mrb[0].mxu0
    %v526 = vpop.f32.mrb[0].mxu0
    %v527 = vadd.f32 0.0, %v526
    %v528 = vpop.f32.mrb[0].mxu0
    %529 = vmatprep.mubr.bf16.mxu0 0
    %530 = vmatmul.mubr.bf16.gmra.mrb[0].mxu0 %v313
    %v531 = vpop.f32.mrb[0].mxu0
    %v532 = vadd.f32 0.0, %v531
    %v533 = vpop.f32.mrb[0].mxu0
    %v534 = vpop.f32.mrb[0].mxu0
    %v535 = vadd.f32 0.0, %v534
    %v536 = vpop.f32.mrb[0].mxu0
    %537 = vmatprep.mubr.bf16.mxu0 0
    %538 = vmatmul.mubr.bf16.gmra.mrb[0].mxu0 %v316
    %v539 = vpop.f32.mrb[0].mxu0
    %v540 = vadd.f32 0.0, %v539
    %v541 = vpop.f32.mrb[0].mxu0
    %v542 = vpop.f32.mrb[0].mxu0
    %v543 = vadd.f32 0.0, %v542
    %v544 = vpop.f32.mrb[0].mxu0
    %545 = vmatprep.mubr.bf16.mxu0 0
    %546 = vmatmul.mubr.bf16.gmra.mrb[0].mxu0 %v319
    %v547 = vpop.f32.mrb[0].mxu0
    %v548 = vadd.f32 0.0, %v547
    %v549 = vpop.f32.mrb[0].mxu0
    %v550 = vpop.f32.mrb[0].mxu0
    %v551 = vadd.f32 0.0, %v550
    %v552 = vpop.f32.mrb[0].mxu0
    %553 = vmatprep.mubr.bf16.mxu0 0
    %554 = vmatmul.mubr.bf16.gmra.mrb[0].mxu0 %v322
    %v555 = vpop.f32.mrb[0].mxu0
    %v556 = vadd.f32 0.0, %v555
    %v557 = vpop.f32.mrb[0].mxu0
    %v558 = vpop.f32.mrb[0].mxu0
    %v559 = vadd.f32 0.0, %v558
    %v560 = vpop.f32.mrb[0].mxu0
    %561 = vmatprep.mubr.bf16.mxu0 0
    %562 = vmatmul.mubr.bf16.gmra.mrb[0].mxu0 %v325
    %v563 = vpop.f32.mrb[0].mxu0
    %v564 = vadd.f32 0.0, %v563
    %v565 = vpop.f32.mrb[0].mxu0
    %v566 = vpop.f32.mrb[0].mxu0
    %v567 = vadd.f32 0.0, %v566
    %v568 = vpop.f32.mrb[0].mxu0
    %569 = vmatprep.mubr.bf16.mxu0 0
    %570 = vmatmul.mubr.bf16.gmra.mrb[0].mxu0 %v328
    %v571 = vpop.f32.mrb[0].mxu0
    %v572 = vadd.f32 0.0, %v571
    %v573 = vpop.f32.mrb[0].mxu0
    %v574 = vpop.f32.mrb[0].mxu0
    %v575 = vadd.f32 0.0, %v574
    %v576 = vpop.f32.mrb[0].mxu0
    %577 = vmatprep.mubr.bf16.mxu0 0
    %578 = vmatmul.mubr.bf16.gmra.mrb[0].mxu0 %v331
    %v579 = vpop.f32.mrb[0].mxu0
    %v580 = vadd.f32 0.0, %v579
    %v581 = vpop.f32.mrb[0].mxu0
    %v582 = vpop.f32.mrb[0].mxu0
    %v583 = vadd.f32 0.0, %v582
    %v584 = vpop.f32.mrb[0].mxu0
    %585 = vmatprep.mubr.bf16.mxu0 0
    %586 = vmatmul.mubr.bf16.gmra.mrb[0].mxu0 %v334
    %v587 = vpop.f32.mrb[0].mxu0
    %v588 = vadd.f32 0.0, %v587
    %v589 = vpop.f32.mrb[0].mxu0
    %v590 = vpop.f32.mrb[0].mxu0
    %v591 = vadd.f32 0.0, %v590
    %v592 = vpop.f32.mrb[0].mxu0
    %593 = vmatprep.mubr.bf16.mxu0 0
    %594 = vmatmul.mubr.bf16.gmra.mrb[0].mxu0 %v337
    %v595 = vpop.f32.mrb[0].mxu0
    %v596 = vadd.f32 0.0, %v595
    %v597 = vpop.f32.mrb[0].mxu0
    %v598 = vpop.f32.mrb[0].mxu0
    %v599 = vadd.f32 0.0, %v598
    %v600 = vpop.f32.mrb[0].mxu0
    %601 = vmatprep.mubr.bf16.mxu0 0
    %602 = vmatmul.mubr.bf16.gmra.mrb[0].mxu0 %v340
    %v603 = vpop.f32.mrb[0].mxu0
    %v604 = vadd.f32 0.0, %v603
    %v605 = vpop.f32.mrb[0].mxu0
    %v606 = vpop.f32.mrb[0].mxu0
    %v607 = vadd.f32 0.0, %v606
    %v608 = vpop.f32.mrb[0].mxu0
    %609 = vmatprep.mubr.bf16.mxu0 0
    %610 = vmatmul.mubr.bf16.gmra.mrb[0].mxu0 %v343
    %v611 = vpop.f32.mrb[0].mxu0
    %v612 = vadd.f32 0.0, %v611
    %v613 = vpop.f32.mrb[0].mxu0
    %v614 = vpop.f32.mrb[0].mxu0
    %v615 = vadd.f32 0.0, %v614
    %v616 = vpop.f32.mrb[0].mxu0
    %617 = vmatprep.mubr.bf16.mxu0 0
    %618 = vmatmul.mubr.bf16.gmra.mrb[0].mxu0 %v346
    %v619 = vpop.f32.mrb[0].mxu0
    %v620 = vadd.f32 0.0, %v619
    %v621 = vpop.f32.mrb[0].mxu0
    %v622 = vpop.f32.mrb[0].mxu0
    %v623 = vadd.f32 0.0, %v622
    %v624 = vpop.f32.mrb[0].mxu0
    %625 = vmatprep.mubr.bf16.mxu0 0
    %626 = vmatmul.mubr.bf16.gmra.mrb[0].mxu0 %v349
    %v627 = vpop.f32.mrb[0].mxu0
    %v628 = vadd.f32 0.0, %v627
    %v629 = vpop.f32.mrb[0].mxu0
    %v630 = vpop.f32.mrb[0].mxu0
    %v631 = vadd.f32 0.0, %v630
    %v632 = vpop.f32.mrb[0].mxu0
    %633 = vmatprep.mubr.bf16.mxu0 0
    %634 = vmatmul.mubr.bf16.gmra.mrb[0].mxu0 %v352
    %v635 = vpop.f32.mrb[0].mxu0
    %v636 = vadd.f32 0.0, %v635
    %v637 = vpop.f32.mrb[0].mxu0
    %v638 = vpop.f32.mrb[0].mxu0
    %v639 = vadd.f32 0.0, %v638
    %v640 = vpop.f32.mrb[0].mxu0
    %641 = vmatprep.mubr.bf16.mxu0 0
    %642 = vmatmul.mubr.bf16.gmra.mrb[0].mxu0 %v355
    %v643 = vpop.f32.mrb[0].mxu0
    %v644 = vadd.f32 0.0, %v643
    %v645 = vpop.f32.mrb[0].mxu0
    %v646 = vpop.f32.mrb[0].mxu0
    %v647 = vadd.f32 0.0, %v646
    %v648 = vpop.f32.mrb[0].mxu0
    %649 = vdwg.mxu0
    %p650 = scmp.eq.s32.totalorder 0, 0
    // Predicated region
    $region10: #{tpu_custom_call.1} parent=1 // pred_check
      %p651 = pneg %p650
    $region11: #{tpu_custom_call.1} parent=1 // pred_check_branch
      %653 = sbr.rel (%p651) target = $region13
    $region12: #{tpu_custom_call.1} parent=1 // pred_region
      %654 = vst [vmem:[#allocation2] sm:$0x1] 0.0
      %655 = vst [vmem:[#allocation4] sm:$0x1] 0.0
    $region13: #{tpu_custom_call.1} parent=1 // pred_fallthru
      _
    %v656 = vld [vmem:[#allocation2] sm:$0x1]
    %v657 = vadd.f32 %v396, %v399
    %v658 = vadd.f32 %v657, %v404
    %v659 = vadd.f32 %v658, %v407
    %v660 = vadd.f32 %v659, %v412
    %v661 = vadd.f32 %v660, %v415
    %v662 = vadd.f32 %v661, %v420
    %v663 = vadd.f32 %v662, %v423
    %v664 = vadd.f32 %v663, %v428
    %v665 = vadd.f32 %v664, %v431
    %v666 = vadd.f32 %v665, %v436
    %v667 = vadd.f32 %v666, %v439
    %v668 = vadd.f32 %v667, %v444
    %v669 = vadd.f32 %v668, %v447
    %v670 = vadd.f32 %v669, %v452
    %v671 = vadd.f32 %v670, %v455
    %v672 = vadd.f32 %v671, %v460
    %v673 = vadd.f32 %v672, %v463
    %v674 = vadd.f32 %v673, %v468
    %v675 = vadd.f32 %v674, %v471
    %v676 = vadd.f32 %v675, %v476
    %v677 = vadd.f32 %v676, %v479
    %v678 = vadd.f32 %v677, %v484
    %v679 = vadd.f32 %v678, %v487
    %v680 = vadd.f32 %v679, %v492
    %v681 = vadd.f32 %v680, %v495
    %v682 = vadd.f32 %v681, %v500
    %v683 = vadd.f32 %v682, %v503
    %v684 = vadd.f32 %v683, %v508
    %v685 = vadd.f32 %v684, %v511
    %v686 = vadd.f32 %v685, %v516
    %v687 = vadd.f32 %v686, %v519
    %v688 = vadd.f32 %v687, %v524
    %v689 = vadd.f32 %v688, %v527
    %v690 = vadd.f32 %v689, %v532
    %v691 = vadd.f32 %v690, %v535
    %v692 = vadd.f32 %v691, %v540
    %v693 = vadd.f32 %v692, %v543
    %v694 = vadd.f32 %v693, %v548
    %v695 = vadd.f32 %v694, %v551
    %v696 = vadd.f32 %v695, %v556
    %v697 = vadd.f32 %v696, %v559
    %v698 = vadd.f32 %v697, %v564
    %v699 = vadd.f32 %v698, %v567
    %v700 = vadd.f32 %v699, %v572
    %v701 = vadd.f32 %v700, %v575
    %v702 = vadd.f32 %v701, %v580
    %v703 = vadd.f32 %v702, %v583
    %v704 = vadd.f32 %v703, %v588
    %v705 = vadd.f32 %v704, %v591
    %v706 = vadd.f32 %v705, %v596
    %v707 = vadd.f32 %v706, %v599
    %v708 = vadd.f32 %v707, %v604
    %v709 = vadd.f32 %v708, %v607
    %v710 = vadd.f32 %v709, %v612
    %v711 = vadd.f32 %v710, %v615
    %v712 = vadd.f32 %v711, %v620
    %v713 = vadd.f32 %v712, %v623
    %v714 = vadd.f32 %v713, %v628
    %v715 = vadd.f32 %v714, %v631
    %v716 = vadd.f32 %v715, %v636
    %v717 = vadd.f32 %v716, %v639
    %v718 = vadd.f32 %v717, %v644
    %v719 = vadd.f32 %v718, %v647
    %v720 = vrot.slane %v719, 4
    %v721 = vadd.f32 %v719, %v720
    %v722 = vrot.slane %v721, 2
    %v723 = vadd.f32 %v721, %v722
    %v724 = vrot.slane %v723, 1
    %v725 = vadd.f32 %v723, %v724
    %v726 = vadd.f32 %v656, %v725
    %727 = vst [vmem:[#allocation2] sm:$0x1] %v726
    %v728 = vld [vmem:[#allocation4] sm:$0x1]
    %v729 = vmul.f32 %v396, %v396
    %v730 = vmul.f32 %v399, %v399
    %v731 = vmul.f32 %v404, %v404
    %v732 = vmul.f32 %v407, %v407
    %v733 = vmul.f32 %v412, %v412
    %v734 = vmul.f32 %v415, %v415
    %v735 = vmul.f32 %v420, %v420
    %v736 = vmul.f32 %v423, %v423
    %v737 = vmul.f32 %v428, %v428
    %v738 = vmul.f32 %v431, %v431
    %v739 = vmul.f32 %v436, %v436
    %v740 = vmul.f32 %v439, %v439
    %v741 = vmul.f32 %v444, %v444
    %v742 = vmul.f32 %v447, %v447
    %v743 = vmul.f32 %v452, %v452
    %v744 = vmul.f32 %v455, %v455
    %v745 = vmul.f32 %v460, %v460
    %v746 = vmul.f32 %v463, %v463
    %v747 = vmul.f32 %v468, %v468
    %v748 = vmul.f32 %v471, %v471
    %v749 = vmul.f32 %v476, %v476
    %v750 = vmul.f32 %v479, %v479
    %v751 = vmul.f32 %v484, %v484
    %v752 = vmul.f32 %v487, %v487
    %v753 = vmul.f32 %v492, %v492
    %v754 = vmul.f32 %v495, %v495
    %v755 = vmul.f32 %v500, %v500
    %v756 = vmul.f32 %v503, %v503
    %v757 = vmul.f32 %v508, %v508
    %v758 = vmul.f32 %v511, %v511
    %v759 = vmul.f32 %v516, %v516
    %v760 = vmul.f32 %v519, %v519
    %v761 = vmul.f32 %v524, %v524
    %v762 = vmul.f32 %v527, %v527
    %v763 = vmul.f32 %v532, %v532
    %v764 = vmul.f32 %v535, %v535
    %v765 = vmul.f32 %v540, %v540
    %v766 = vmul.f32 %v543, %v543
    %v767 = vmul.f32 %v548, %v548
    %v768 = vmul.f32 %v551, %v551
    %v769 = vmul.f32 %v556, %v556
    %v770 = vmul.f32 %v559, %v559
    %v771 = vmul.f32 %v564, %v564
    %v772 = vmul.f32 %v567, %v567
    %v773 = vmul.f32 %v572, %v572
    %v774 = vmul.f32 %v575, %v575
    %v775 = vmul.f32 %v580, %v580
    %v776 = vmul.f32 %v583, %v583
    %v777 = vmul.f32 %v588, %v588
    %v778 = vmul.f32 %v591, %v591
    %v779 = vmul.f32 %v596, %v596
    %v780 = vmul.f32 %v599, %v599
    %v781 = vmul.f32 %v604, %v604
    %v782 = vmul.f32 %v607, %v607
    %v783 = vmul.f32 %v612, %v612
    %v784 = vmul.f32 %v615, %v615
    %v785 = vmul.f32 %v620, %v620
    %v786 = vmul.f32 %v623, %v623
    %v787 = vmul.f32 %v628, %v628
    %v788 = vmul.f32 %v631, %v631
    %v789 = vmul.f32 %v636, %v636
    %v790 = vmul.f32 %v639, %v639
    %v791 = vmul.f32 %v644, %v644
    %v792 = vmul.f32 %v647, %v647
    %v793 = vadd.f32 %v729, %v730
    %v794 = vadd.f32 %v793, %v731
    %v795 = vadd.f32 %v794, %v732
    %v796 = vadd.f32 %v795, %v733
    %v797 = vadd.f32 %v796, %v734
    %v798 = vadd.f32 %v797, %v735
    %v799 = vadd.f32 %v798, %v736
    %v800 = vadd.f32 %v799, %v737
    %v801 = vadd.f32 %v800, %v738
    %v802 = vadd.f32 %v801, %v739
    %v803 = vadd.f32 %v802, %v740
    %v804 = vadd.f32 %v803, %v741
    %v805 = vadd.f32 %v804, %v742
    %v806 = vadd.f32 %v805, %v743
    %v807 = vadd.f32 %v806, %v744
    %v808 = vadd.f32 %v807, %v745
    %v809 = vadd.f32 %v808, %v746
    %v810 = vadd.f32 %v809, %v747
    %v811 = vadd.f32 %v810, %v748
    %v812 = vadd.f32 %v811, %v749
    %v813 = vadd.f32 %v812, %v750
    %v814 = vadd.f32 %v813, %v751
    %v815 = vadd.f32 %v814, %v752
    %v816 = vadd.f32 %v815, %v753
    %v817 = vadd.f32 %v816, %v754
    %v818 = vadd.f32 %v817, %v755
    %v819 = vadd.f32 %v818, %v756
    %v820 = vadd.f32 %v819, %v757
    %v821 = vadd.f32 %v820, %v758
    %v822 = vadd.f32 %v821, %v759
    %v823 = vadd.f32 %v822, %v760
    %v824 = vadd.f32 %v823, %v761
    %v825 = vadd.f32 %v824, %v762
    %v826 = vadd.f32 %v825, %v763
    %v827 = vadd.f32 %v826, %v764
    %v828 = vadd.f32 %v827, %v765
    %v829 = vadd.f32 %v828, %v766
    %v830 = vadd.f32 %v829, %v767
    %v831 = vadd.f32 %v830, %v768
    %v832 = vadd.f32 %v831, %v769
    %v833 = vadd.f32 %v832, %v770
    %v834 = vadd.f32 %v833, %v771
    %v835 = vadd.f32 %v834, %v772
    %v836 = vadd.f32 %v835, %v773
    %v837 = vadd.f32 %v836, %v774
    %v838 = vadd.f32 %v837, %v775
    %v839 = vadd.f32 %v838, %v776
    %v840 = vadd.f32 %v839, %v777
    %v841 = vadd.f32 %v840, %v778
    %v842 = vadd.f32 %v841, %v779
    %v843 = vadd.f32 %v842, %v780
    %v844 = vadd.f32 %v843, %v781
    %v845 = vadd.f32 %v844, %v782
    %v846 = vadd.f32 %v845, %v783
    %v847 = vadd.f32 %v846, %v784
    %v848 = vadd.f32 %v847, %v785
    %v849 = vadd.f32 %v848, %v786
    %v850 = vadd.f32 %v849, %v787
    %v851 = vadd.f32 %v850, %v788
    %v852 = vadd.f32 %v851, %v789
    %v853 = vadd.f32 %v852, %v790
    %v854 = vadd.f32 %v853, %v791
    %v855 = vadd.f32 %v854, %v792
    %v856 = vrot.slane %v855, 4
    %v857 = vadd.f32 %v855, %v856
    %v858 = vrot.slane %v857, 2
    %v859 = vadd.f32 %v857, %v858
    %v860 = vrot.slane %v859, 1
    %v861 = vadd.f32 %v859, %v860
    %v862 = vadd.f32 %v728, %v861
    %863 = vst [vmem:[#allocation4] sm:$0x1] %v862
    // Predicated region
    $region14: #{tpu_custom_call.1} parent=1 // pred_check
      _
    $region15: #{tpu_custom_call.1} parent=1 // pred_check_branch
      %865 = sbr.rel (0) target = $region17
    $region16: #{tpu_custom_call.1} parent=1 // pred_region
      %s867 = ssub.s32 16, 16
      %868 = vsyncadd [#allocation3], %s867
      %s870 = sshll.u32 [#allocation2], 4
      %s871 = int_to_ptr.vmem [resolvable:$true] %s870
      %873 = dma.vmem_to_hbm [thread:$0]  %s871, 16, %s2, [#allocation3]
    $region17: #{tpu_custom_call.1} parent=1 // pred_fallthru
      _
    // Predicated region
    $region18: #{tpu_custom_call.1} parent=1 // pred_check
      _
    $region19: #{tpu_custom_call.1} parent=1 // pred_check_branch
      %875 = sbr.rel (0) target = $region21
    $region20: #{tpu_custom_call.1} parent=1 // pred_region
      %s877 = ssub.s32 16, 16
      %878 = vsyncadd [#allocation5], %s877
      %s880 = sshll.u32 [#allocation4], 4
      %s881 = int_to_ptr.vmem [resolvable:$true] %s880
      %883 = dma.vmem_to_hbm [thread:$0]  %s881, 16, %s3, [#allocation5]
    $region21: #{tpu_custom_call.1} parent=1 // pred_fallthru
      _
    // Predicated region
    $region22: #{tpu_custom_call.1} parent=1 // pred_check
      _
    $region23: #{tpu_custom_call.1} parent=1 // pred_check_branch
      %885 = sbr.rel (0) target = $region25
    $region24: #{tpu_custom_call.1} parent=1 // pred_region
      %886 = dma.done [#allocation3], 16
    $region25: #{tpu_custom_call.1} parent=1 // pred_fallthru
      _
    // Predicated region
    $region26: #{tpu_custom_call.1} parent=1 // pred_check
      _
    $region27: #{tpu_custom_call.1} parent=1 // pred_check_branch
      %888 = sbr.rel (0) target = $region29
    $region28: #{tpu_custom_call.1} parent=1 // pred_region
      %889 = dma.done [#allocation5], 16
    $region29: #{tpu_custom_call.1} parent=1 // pred_fallthru
      _
    %890 = vsyncpa [#allocation3], 1
    %891 = vsyncpa [#allocation5], 1

</llo_original>
